<compile_context>
chip_gen: v5e
topology: v5e:2x2
jax: 0.10.0
libtpu: 0.0.40
codegen_flags: <defaults>
</compile_context>

<pallas_src>
import jax
import jax.numpy as jnp
from jax.experimental import pallas as pl
from jax.experimental.pallas import tpu as pltpu


def _round_up(x, m):
    return (x + m - 1) // m * m


def mlp_kernel(xT_ref, w1_ref, b1_ref, w2_ref, b2_ref, w3_ref, b3_ref, o_ref):
    # xT_ref: (F, TB) -- features on sublanes, batch on lanes (lane-dense).
    xT = xT_ref[...]
    h1 = jnp.dot(w1_ref[...], xT, preferred_element_type=jnp.float32) + b1_ref[...]
    h1 = jnp.maximum(h1, 0.0)
    h2 = jnp.dot(w2_ref[...], h1, preferred_element_type=jnp.float32) + b2_ref[...]
    h2 = jnp.maximum(h2, 0.0)
    out = jnp.dot(w3_ref[...], h2, preferred_element_type=jnp.float32) + b3_ref[...]
    o_ref[...] = out.astype(o_ref.dtype)  # (1, TB) lane-dense store


def padded_embedding_forward(x, params, *, block_batch=1024):
    """x: (B, lanes*horizon) float32 -> (B, 1) float32."""
    w1, b1, w2, b2, w3, b3 = params
    B, F = x.shape
    hidden = w1.shape[0]

    # Lane-dense batch tile: multiple of 128, no bigger than needed for small B.
    TB = max(128, min(_round_up(block_batch, 128), _round_up(B, 128)))
    B_pad = _round_up(B, TB)
    n_tiles = B_pad // TB

    # Present x as (F, B_pad): layout plumbing done in the wrapper.
    xT = jnp.pad(x.T, ((0, 0), (0, B_pad - B)))

    itemsize = 4
    w_bytes = (hidden * F + hidden + hidden * hidden + hidden + hidden + 1) * itemsize
    tile_bytes = (F * TB            # x^T tile
                  + 2 * hidden * TB  # h1 / h2 intermediates
                  + 8 * TB) * itemsize  # out tile (sublane-padded 1 -> 8)
    vmem_limit = int(min(max(2 * tile_bytes + 2 * w_bytes + (4 << 20), 16 << 20),
                         32 << 20))

    flops = 2 * (F * hidden + hidden * hidden + hidden) * B_pad
    bytes_accessed = (F * B_pad + 8 * B_pad) * itemsize + w_bytes

    const = lambda i: (0, 0)  # weights/biases: same block every step (resident)

    out = pl.pallas_call(
        mlp_kernel,
        out_shape=jax.ShapeDtypeStruct((1, B_pad), jnp.float32),
        grid=(n_tiles,),
        in_specs=[
            pl.BlockSpec((F, TB), lambda i: (0, i)),   # x^T tile (pipelined)
            pl.BlockSpec((hidden, F), const),          # W1
            pl.BlockSpec((hidden, 1), const),          # b1
            pl.BlockSpec((hidden, hidden), const),     # W2
            pl.BlockSpec((hidden, 1), const),          # b2
            pl.BlockSpec((1, hidden), const),          # W3
            pl.BlockSpec((1, 1), const),               # b3
        ],
        out_specs=pl.BlockSpec((1, TB), lambda i: (0, i)),
        compiler_params=pltpu.CompilerParams(
            dimension_semantics=("parallel",),
            vmem_limit_bytes=vmem_limit,
        ),
        cost_estimate=pl.CostEstimate(
            flops=flops, transcendentals=0, bytes_accessed=bytes_accessed),
    )(xT, w1, b1, w2, b2, w3, b3)

    return out[:, :B].T  # (B, 1)


def init_params(key, in_features, hidden=32, out_features=1):
    """PyTorch nn.Linear-style init: weight (out, in), bias (out, 1),
    uniform +/- 1/sqrt(fan_in)."""
    keys = jax.random.split(key, 6)

    def lin(kw, kb, fan_in, fan_out):
        bound = 1.0 / jnp.sqrt(jnp.float32(fan_in))
        w = jax.random.uniform(kw, (fan_out, fan_in), jnp.float32, -bound, bound)
        b = jax.random.uniform(kb, (fan_out, 1), jnp.float32, -bound, bound)
        return w, b

    w1, b1 = lin(keys[0], keys[1], in_features, hidden)
    w2, b2 = lin(keys[2], keys[3], hidden, hidden)
    w3, b3 = lin(keys[4], keys[5], hidden, out_features)
    return (w1, b1, w2, b2, w3, b3)


if __name__ == "__main__":
    # Small shapes consistent with the module: 2 lanes, horizon 16 -> 32 input
    # features, batch of 2. (Perf wins from tiling/layout materialize at large
    # batch; this just validates correctness.)
    lanes, horizon, batch = 2, 16, 2
    in_features = lanes * horizon

    key = jax.random.PRNGKey(0)
    k_x, k_p = jax.random.split(key)
    x = jax.random.normal(k_x, (batch, in_features), dtype=jnp.float32)
    params = init_params(k_p, in_features)

    out = padded_embedding_forward(x, params)
    out = jax.block_until_ready(out)

    # Reference check in plain JAX (same math as the PyTorch Sequential).
    w1, b1, w2, b2, w3, b3 = params
    ref = jnp.maximum(x @ w1.T + b1.T, 0.0)
    ref = jnp.maximum(ref @ w2.T + b2.T, 0.0)
    ref = ref @ w3.T + b3.T
    assert out.shape == (batch, 1)
    assert jnp.allclose(out, ref, atol=1e-5, rtol=1e-5)

    # TODO(synk): state_transform/action_transform/greedy_heuristic operate on
    # a Python `automaton` object (lists, None checks) with no tensor hot path,
    # so they are intentionally not lowered to Pallas.
    print("KERNEL_OK")
</pallas_src>

<mosaic_0001>
module attributes {stable_mosaic.version = 11 : i64} {
  func.func @mlp_kernel(%arg0: i32, %arg1: memref<32x128xf32, #tpu.memory_space<vmem>>, %arg2: memref<32x32xf32, #tpu.memory_space<vmem>>, %arg3: memref<32x1xf32, #tpu.memory_space<vmem>>, %arg4: memref<32x32xf32, #tpu.memory_space<vmem>>, %arg5: memref<32x1xf32, #tpu.memory_space<vmem>>, %arg6: memref<1x32xf32, #tpu.memory_space<vmem>>, %arg7: memref<1x1xf32, #tpu.memory_space<vmem>>, %arg8: memref<1x128xf32, #tpu.memory_space<vmem>>) attributes {dimension_semantics = [#tpu.dimension_semantics<parallel>], iteration_bounds = array<i64: 1>, scalar_prefetch = 0 : i64, scratch_operands = 0 : i64, tpu.core_type = #tpu.core_type<tc>, window_params = [{transform_indices = @transform_0, window_bounds = array<i64: 32, 128>}, {pipeline_mode = #tpu.pipeline_mode<synchronous>, transform_indices = @transform_1, window_bounds = array<i64: 32, 32>}, {pipeline_mode = #tpu.pipeline_mode<synchronous>, transform_indices = @transform_2, window_bounds = array<i64: 32, 1>}, {pipeline_mode = #tpu.pipeline_mode<synchronous>, transform_indices = @transform_3, window_bounds = array<i64: 32, 32>}, {pipeline_mode = #tpu.pipeline_mode<synchronous>, transform_indices = @transform_4, window_bounds = array<i64: 32, 1>}, {pipeline_mode = #tpu.pipeline_mode<synchronous>, transform_indices = @transform_5, window_bounds = array<i64: 1, 32>}, {pipeline_mode = #tpu.pipeline_mode<synchronous>, transform_indices = @transform_6, window_bounds = array<i64: 1, 1>}, {transform_indices = @transform_7, window_bounds = array<i64: 1, 128>}]} {
    %c0 = arith.constant 0 : index
    %c0_0 = arith.constant 0 : index
    %0 = vector.load %arg1[%c0, %c0_0] : memref<32x128xf32, #tpu.memory_space<vmem>>, vector<32x128xf32>
    %c0_1 = arith.constant 0 : index
    %c0_2 = arith.constant 0 : index
    %1 = vector.load %arg2[%c0_1, %c0_2] : memref<32x32xf32, #tpu.memory_space<vmem>>, vector<32x32xf32>
    %cst = arith.constant dense<0.000000e+00> : vector<32x128xf32>
    %2 = tpu.matmul %1, %0, %cst {dimension_numbers = #tpu.dot_dimension_numbers<[1], [0], [0], [1], [0, 0, 1, 1], [], []>} : vector<32x32xf32>, vector<32x128xf32>, vector<32x128xf32> -> vector<32x128xf32>
    %c0_3 = arith.constant 0 : index
    %c0_4 = arith.constant 0 : index
    %3 = vector.load %arg3[%c0_3, %c0_4] : memref<32x1xf32, #tpu.memory_space<vmem>>, vector<32x1xf32>
    %4 = vector.broadcast %3 : vector<32x1xf32> to vector<32x128xf32>
    %5 = arith.addf %2, %4 : vector<32x128xf32>
    %cst_5 = arith.constant 0.000000e+00 : f32
    %6 = vector.broadcast %cst_5 : f32 to vector<32x128xf32>
    %7 = arith.maximumf %5, %6 : vector<32x128xf32>
    %c0_6 = arith.constant 0 : index
    %c0_7 = arith.constant 0 : index
    %8 = vector.load %arg4[%c0_6, %c0_7] : memref<32x32xf32, #tpu.memory_space<vmem>>, vector<32x32xf32>
    %cst_8 = arith.constant dense<0.000000e+00> : vector<32x128xf32>
    %9 = tpu.matmul %8, %7, %cst_8 {dimension_numbers = #tpu.dot_dimension_numbers<[1], [0], [0], [1], [0, 0, 1, 1], [], []>} : vector<32x32xf32>, vector<32x128xf32>, vector<32x128xf32> -> vector<32x128xf32>
    %c0_9 = arith.constant 0 : index
    %c0_10 = arith.constant 0 : index
    %10 = vector.load %arg5[%c0_9, %c0_10] : memref<32x1xf32, #tpu.memory_space<vmem>>, vector<32x1xf32>
    %11 = vector.broadcast %10 : vector<32x1xf32> to vector<32x128xf32>
    %12 = arith.addf %9, %11 : vector<32x128xf32>
    %cst_11 = arith.constant 0.000000e+00 : f32
    %13 = vector.broadcast %cst_11 : f32 to vector<32x128xf32>
    %14 = arith.maximumf %12, %13 : vector<32x128xf32>
    %c0_12 = arith.constant 0 : index
    %c0_13 = arith.constant 0 : index
    %15 = vector.load %arg6[%c0_12, %c0_13] : memref<1x32xf32, #tpu.memory_space<vmem>>, vector<1x32xf32>
    %cst_14 = arith.constant dense<0.000000e+00> : vector<1x128xf32>
    %16 = tpu.matmul %15, %14, %cst_14 {dimension_numbers = #tpu.dot_dimension_numbers<[1], [0], [0], [1], [0, 0, 1, 1], [], []>} : vector<1x32xf32>, vector<32x128xf32>, vector<1x128xf32> -> vector<1x128xf32>
    %c0_15 = arith.constant 0 : index
    %c0_16 = arith.constant 0 : index
    %17 = vector.load %arg7[%c0_15, %c0_16] : memref<1x1xf32, #tpu.memory_space<vmem>>, vector<1x1xf32>
    %18 = vector.broadcast %17 : vector<1x1xf32> to vector<1x128xf32>
    %19 = arith.addf %16, %18 : vector<1x128xf32>
    %c0_17 = arith.constant 0 : index
    %c0_18 = arith.constant 0 : index
    %20 = vector.load %arg8[%c0_17, %c0_18] : memref<1x128xf32, #tpu.memory_space<vmem>>, vector<1x128xf32>
    tpu.vector_store %arg8[%c0_17, %c0_18], %19 {strides = array<i32>} : memref<1x128xf32, #tpu.memory_space<vmem>>, vector<1x128xf32>,
    return
  }
  func.func @transform_0(%arg0: i32) -> (i32, i32) {
    %c0_i32 = arith.constant 0 : i32
    %c0_i32_0 = arith.constant 0 : i32
    return %c0_i32, %arg0 : i32, i32
  }
  func.func @transform_1(%arg0: i32) -> (i32, i32) {
    %c0_i32 = arith.constant 0 : i32
    %c0_i32_0 = arith.constant 0 : i32
    %c0_i32_1 = arith.constant 0 : i32
    return %c0_i32, %c0_i32_0 : i32, i32
  }
  func.func @transform_2(%arg0: i32) -> (i32, i32) {
    %c0_i32 = arith.constant 0 : i32
    %c0_i32_0 = arith.constant 0 : i32
    %c0_i32_1 = arith.constant 0 : i32
    return %c0_i32, %c0_i32_0 : i32, i32
  }
  func.func @transform_3(%arg0: i32) -> (i32, i32) {
    %c0_i32 = arith.constant 0 : i32
    %c0_i32_0 = arith.constant 0 : i32
    %c0_i32_1 = arith.constant 0 : i32
    return %c0_i32, %c0_i32_0 : i32, i32
  }
  func.func @transform_4(%arg0: i32) -> (i32, i32) {
    %c0_i32 = arith.constant 0 : i32
    %c0_i32_0 = arith.constant 0 : i32
    %c0_i32_1 = arith.constant 0 : i32
    return %c0_i32, %c0_i32_0 : i32, i32
  }
  func.func @transform_5(%arg0: i32) -> (i32, i32) {
    %c0_i32 = arith.constant 0 : i32
    %c0_i32_0 = arith.constant 0 : i32
    %c0_i32_1 = arith.constant 0 : i32
    return %c0_i32, %c0_i32_0 : i32, i32
  }
  func.func @transform_6(%arg0: i32) -> (i32, i32) {
    %c0_i32 = arith.constant 0 : i32
    %c0_i32_0 = arith.constant 0 : i32
    %c0_i32_1 = arith.constant 0 : i32
    return %c0_i32, %c0_i32_0 : i32, i32
  }
  func.func @transform_7(%arg0: i32) -> (i32, i32) {
    %c0_i32 = arith.constant 0 : i32
    %c0_i32_0 = arith.constant 0 : i32
    return %c0_i32, %arg0 : i32, i32
  }
}

</mosaic_0001>

<llo_original>
// kernel: tpu_custom_call.1
$region0: #{tpu_custom_call.1}
  #allocation0 [shape = 'u32[]', space=smem, size = 0x4, offset = 0x4, fixed_abs, tag = 'smem constant byte address 0x4 - core index']
  #allocation1 [shape = 'u32[72,128]{1,0:T(1,128)}', space=vmem, size = 0x9000, scoped, tag = 'internal scratch']
  #allocation2 [shape = 'f32[1,1]{1,0:T(1,128)S(1)}', space=vmem, size = 0x200, scoped, tag = 'scoped memory for tpu_custom_call.1']
  %s0 = inlined_call_operand.vmem [shape: f32[32,128], index: 0, kind: input, shape index: {}]
  %s1 = inlined_call_operand.vmem [shape: f32[32,32], index: 1, kind: input, shape index: {}]
  %s2 = inlined_call_operand.vmem [shape: f32[32,1], index: 2, kind: input, shape index: {}]
  %s3 = inlined_call_operand.hbm [shape: f32[32,32], index: 3, kind: input, shape index: {}]
  %s4 = inlined_call_operand.vmem [shape: f32[32,1], index: 4, kind: input, shape index: {}]
  %s5 = inlined_call_operand.vmem [shape: f32[1,32], index: 5, kind: input, shape index: {}]
  %s6 = inlined_call_operand.<no memory space> [shape: f32[1,1], index: 6, kind: input, shape index: {}]
  %s7 = inlined_call_operand.hbm [shape: f32[1,128], index: 7, kind: output, shape index: {}]
  %s8 = sld [smem:[#allocation0]]
  $region42: #{tpu_custom_call.1} parent=0
    _
  %s10 = ssub.s32 1, %s8
  %s11 = scalar_select 0, %s10, %s8
  %v12 = vstv %s6
  %13 = vst [vmem:[#allocation2] sm:$0x1] %v12
  $region1: #{tpu_custom_call.1} parent=0
    #allocation3 [shape = 'u8[16384]{0}', space=vmem, size = 0x4000, scoped, tag = 'input window, operand 3, single buffered']
    #allocation4 [shape = 's32[1]{0}', space=sflag, size = 0x4, scoped, tag = 'scoped memory for tpu_custom_call.1']
    #allocation5 [shape = 's32[1]{0}', space=sflag, size = 0x4, scoped, tag = 'scoped memory for tpu_custom_call.1']
    #allocation6 [shape = 'u8[512]{0}', space=vmem, size = 0x400, scoped, tag = 'output window, operand 0, single buffered']
    %14 = vsyncpa [#allocation4], 0
    %15 = vsyncpa [#allocation5], 0
    // Predicated region
    $region2: #{tpu_custom_call.1} parent=1 // pred_check
      _
    $region3: #{tpu_custom_call.1} parent=1 // pred_check_branch
      %17 = sbr.rel (0) target = $region5
    $region4: #{tpu_custom_call.1} parent=1 // pred_region
      _
    $region5: #{tpu_custom_call.1} parent=1 // pred_fallthru
      _
    // Predicated region
    $region6: #{tpu_custom_call.1} parent=1 // pred_check
      _
    $region7: #{tpu_custom_call.1} parent=1 // pred_check_branch
      %19 = sbr.rel (0) target = $region9
    $region8: #{tpu_custom_call.1} parent=1 // pred_region
      _
    $region9: #{tpu_custom_call.1} parent=1 // pred_fallthru
      _
    // Predicated region
    $region10: #{tpu_custom_call.1} parent=1 // pred_check
      _
    $region11: #{tpu_custom_call.1} parent=1 // pred_check_branch
      %21 = sbr.rel (0) target = $region13
    $region12: #{tpu_custom_call.1} parent=1 // pred_region
      _
    $region13: #{tpu_custom_call.1} parent=1 // pred_fallthru
      _
    // Predicated region
    $region14: #{tpu_custom_call.1} parent=1 // pred_check
      _
    $region15: #{tpu_custom_call.1} parent=1 // pred_check_branch
      %23 = sbr.rel (0) target = $region17
    $region16: #{tpu_custom_call.1} parent=1 // pred_region
      %25 = vsyncadd [#allocation4], 0
      %s26 = sshll.u32 %s3, 4
      %s27 = int_to_ptr.hbm [resolvable:$true] %s26
      %s28 = sshll.u32 [#allocation3], 4
      %s29 = int_to_ptr.vmem [resolvable:$true] %s28
      %34 = dma.hbm_to_vmem [thread:$0]  %s27, 512, %s29, [#allocation4], 128, 128, 8
    $region17: #{tpu_custom_call.1} parent=1 // pred_fallthru
      _
    // Predicated region
    $region18: #{tpu_custom_call.1} parent=1 // pred_check
      _
    $region19: #{tpu_custom_call.1} parent=1 // pred_check_branch
      %36 = sbr.rel (0) target = $region21
    $region20: #{tpu_custom_call.1} parent=1 // pred_region
      _
    $region21: #{tpu_custom_call.1} parent=1 // pred_fallthru
      _
    // Predicated region
    $region22: #{tpu_custom_call.1} parent=1 // pred_check
      _
    $region23: #{tpu_custom_call.1} parent=1 // pred_check_branch
      %38 = sbr.rel (0) target = $region25
    $region24: #{tpu_custom_call.1} parent=1 // pred_region
      _
    $region25: #{tpu_custom_call.1} parent=1 // pred_fallthru
      _
    // Predicated region
    $region26: #{tpu_custom_call.1} parent=1 // pred_check
      _
    $region27: #{tpu_custom_call.1} parent=1 // pred_check_branch
      %40 = sbr.rel (0) target = $region29
    $region28: #{tpu_custom_call.1} parent=1 // pred_region
      _
    $region29: #{tpu_custom_call.1} parent=1 // pred_fallthru
      _
    // Predicated region
    $region30: #{tpu_custom_call.1} parent=1 // pred_check
      _
    $region31: #{tpu_custom_call.1} parent=1 // pred_check_branch
      %42 = sbr.rel (0) target = $region33
    $region32: #{tpu_custom_call.1} parent=1 // pred_region
      %44 = dma.done [#allocation4], 512
    $region33: #{tpu_custom_call.1} parent=1 // pred_fallthru
      _
    %v45 = vld [vmem:[%s0] sm:$0xff]
    %v46 = vld [vmem:[%s0 + $0x8] sm:$0xff]
    %v47 = vld [vmem:[%s0 + $0x10] sm:$0xff]
    %v48 = vld [vmem:[%s0 + $0x18] sm:$0xff]
    %v49 = vld [vmem:[%s1] sm:$0xff]
    %v50 = vld [vmem:[%s1 + $0x8] sm:$0xff]
    %v51 = vld [vmem:[%s1 + $0x10] sm:$0xff]
    %v52 = vld [vmem:[%s1 + $0x18] sm:$0xff]
    %v53 = vld [vmem:[%s2] sm:$0xff]
    %v54 = vld [vmem:[%s2 + $0x8] sm:$0xff]
    %v55 = vld [vmem:[%s2 + $0x10] sm:$0xff]
    %v56 = vld [vmem:[%s2 + $0x18] sm:$0xff]
    %58 = vset.pattern.permute.xlu0 0
    %59 = vperm.xlu0 %58, %v53
    %v60 = vpop.permute.xlu0 %59
    %63 = vset.pattern.permute.xlu0 0
    %64 = vperm.xlu0 %63, %v54
    %v65 = vpop.permute.xlu0 %64
    %68 = vset.pattern.permute.xlu0 0
    %69 = vperm.xlu0 %68, %v55
    %v70 = vpop.permute.xlu0 %69
    %73 = vset.pattern.permute.xlu0 0
    %74 = vperm.xlu0 %73, %v56
    %v75 = vpop.permute.xlu0 %74
    %vm77 = vcmask 261120
    %v79 = vsel %vm77, %v49, 0
    %v82 = vsel %vm77, %v50, 0
    %v85 = vsel %vm77, %v51, 0
    %v88 = vsel %vm77, %v52, 0
    %90 = vmatpush.msra.mxu0 0.0
    %91 = vmatpush.msra.mxu0 0.0
    %92 = vmatpush.msra.mxu0 0.0
    %93 = vmatpush.msra.mxu0 0.0
    %94 = vmatpush.msra.mxu0 0.0
    %95 = vmatpush.msra.mxu0 0.0
    %96 = vmatpush.msra.mxu0 0.0
    %97 = vmatpush.msra.mxu0 0.0
    %98 = vmatpush.msra.mxu0 0.0
    %99 = vmatpush.msra.mxu0 0.0
    %100 = vmatpush.msra.mxu0 0.0
    %101 = vmatpush.msra.mxu0 0.0
    %102 = vmatpush.msra.mxu0 %v48
    %103 = vmatpush.msra.mxu0 %v47
    %104 = vmatpush.msra.mxu0 %v46
    %105 = vmatpush.msra.mxu0 %v45
    %106 = vmatmul.f32.gmra.mxu0 %v79
    %v107 = vpop.f32.mrf.mxu0
    %v108 = vadd.f32 %v60, %v107
    %109 = vmatmul.f32.gmra.mxu0 %v82
    %v110 = vpop.f32.mrf.mxu0
    %v111 = vadd.f32 %v65, %v110
    %112 = vmatmul.f32.gmra.mxu0 %v85
    %v113 = vpop.f32.mrf.mxu0
    %v114 = vadd.f32 %v70, %v113
    %115 = vmatmul.f32.gmra.mxu0 %v88
    %v116 = vpop.f32.mrf.mxu0
    %v117 = vadd.f32 %v75, %v116
    %118 = vdwg.mxu0
    %v119 = vmax.f32 %v108, 0.0
    %v120 = vmax.f32 %v111, 0.0
    %v121 = vmax.f32 %v114, 0.0
    %v122 = vmax.f32 %v117, 0.0
    %v123 = vld [vmem:[#allocation3] sm:$0xff]
    %v124 = vld [vmem:[#allocation3 + $0x8] sm:$0xff]
    %v125 = vld [vmem:[#allocation3 + $0x10] sm:$0xff]
    %v126 = vld [vmem:[#allocation3 + $0x18] sm:$0xff]
    %v127 = vld [vmem:[%s4] sm:$0xff]
    %v128 = vld [vmem:[%s4 + $0x8] sm:$0xff]
    %v129 = vld [vmem:[%s4 + $0x10] sm:$0xff]
    %v130 = vld [vmem:[%s4 + $0x18] sm:$0xff]
    %132 = vset.pattern.permute.xlu0 0
    %133 = vperm.xlu0 %132, %v127
    %v134 = vpop.permute.xlu0 %133
    %137 = vset.pattern.permute.xlu0 0
    %138 = vperm.xlu0 %137, %v128
    %v139 = vpop.permute.xlu0 %138
    %142 = vset.pattern.permute.xlu0 0
    %143 = vperm.xlu0 %142, %v129
    %v144 = vpop.permute.xlu0 %143
    %147 = vset.pattern.permute.xlu0 0
    %148 = vperm.xlu0 %147, %v130
    %v149 = vpop.permute.xlu0 %148
    %v152 = vsel %vm77, %v123, 0
    %v155 = vsel %vm77, %v124, 0
    %v158 = vsel %vm77, %v125, 0
    %v161 = vsel %vm77, %v126, 0
    %163 = vmatpush.msra.mxu0 0.0
    %164 = vmatpush.msra.mxu0 0.0
    %165 = vmatpush.msra.mxu0 0.0
    %166 = vmatpush.msra.mxu0 0.0
    %167 = vmatpush.msra.mxu0 0.0
    %168 = vmatpush.msra.mxu0 0.0
    %169 = vmatpush.msra.mxu0 0.0
    %170 = vmatpush.msra.mxu0 0.0
    %171 = vmatpush.msra.mxu0 0.0
    %172 = vmatpush.msra.mxu0 0.0
    %173 = vmatpush.msra.mxu0 0.0
    %174 = vmatpush.msra.mxu0 0.0
    %175 = vmatpush.msra.mxu0 %v122
    %176 = vmatpush.msra.mxu0 %v121
    %177 = vmatpush.msra.mxu0 %v120
    %178 = vmatpush.msra.mxu0 %v119
    %179 = vmatmul.f32.gmra.mxu0 %v152
    %v180 = vpop.f32.mrf.mxu0
    %v181 = vadd.f32 %v134, %v180
    %182 = vmatmul.f32.gmra.mxu0 %v155
    %v183 = vpop.f32.mrf.mxu0
    %v184 = vadd.f32 %v139, %v183
    %185 = vmatmul.f32.gmra.mxu0 %v158
    %v186 = vpop.f32.mrf.mxu0
    %v187 = vadd.f32 %v144, %v186
    %188 = vmatmul.f32.gmra.mxu0 %v161
    %v189 = vpop.f32.mrf.mxu0
    %v190 = vadd.f32 %v149, %v189
    %191 = vdwg.mxu0
    %v192 = vmax.f32 %v181, 0.0
    %v193 = vmax.f32 %v184, 0.0
    %v194 = vmax.f32 %v187, 0.0
    %v195 = vmax.f32 %v190, 0.0
    %v196 = vld [vmem:[%s5] sm:$0x1]
    %v197 = vld [vmem:[#allocation2] sm:$0x1]
    %199 = vset.pattern.permute.xlu0 0
    %200 = vperm.xlu0 %199, %v197
    %v201 = vpop.permute.xlu0 %200
    %v203 = vperm.slane %v201, 0
    %v205 = vsel %vm77, %v196, 0
    %207 = vmatpush.msra.mxu0 0.0
    %208 = vmatpush.msra.mxu0 0.0
    %209 = vmatpush.msra.mxu0 0.0
    %210 = vmatpush.msra.mxu0 0.0
    %211 = vmatpush.msra.mxu0 0.0
    %212 = vmatpush.msra.mxu0 0.0
    %213 = vmatpush.msra.mxu0 0.0
    %214 = vmatpush.msra.mxu0 0.0
    %215 = vmatpush.msra.mxu0 0.0
    %216 = vmatpush.msra.mxu0 0.0
    %217 = vmatpush.msra.mxu0 0.0
    %218 = vmatpush.msra.mxu0 0.0
    %219 = vmatpush.msra.mxu0 %v195
    %220 = vmatpush.msra.mxu0 %v194
    %221 = vmatpush.msra.mxu0 %v193
    %222 = vmatpush.msra.mxu0 %v192
    %223 = vmatmul.f32.gmra.mxu0 %v205
    %v224 = vpop.f32.mrf.mxu0
    %v225 = vadd.f32 %v203, %v224
    %226 = vdwg.mxu0
    %227 = vst [vmem:[#allocation6] sm:$0x1] %v225
    // Predicated region
    $region34: #{tpu_custom_call.1} parent=1 // pred_check
      _
    $region35: #{tpu_custom_call.1} parent=1 // pred_check_branch
      %229 = sbr.rel (0) target = $region37
    $region36: #{tpu_custom_call.1} parent=1 // pred_region
      %231 = vsyncadd [#allocation5], 0
      %s233 = sshll.u32 [#allocation6], 4
      %s234 = int_to_ptr.vmem [resolvable:$true] %s233
      %s235 = sshll.u32 %s7, 4
      %s236 = int_to_ptr.hbm [resolvable:$true] %s235
      %238 = dma.vmem_to_hbm [thread:$0]  %s234, 16, %s236, [#allocation5]
    $region37: #{tpu_custom_call.1} parent=1 // pred_fallthru
      _
    // Predicated region
    $region38: #{tpu_custom_call.1} parent=1 // pred_check
      _
    $region39: #{tpu_custom_call.1} parent=1 // pred_check_branch
      %240 = sbr.rel (0) target = $region41
    $region40: #{tpu_custom_call.1} parent=1 // pred_region
      %242 = dma.done [#allocation5], 16
    $region41: #{tpu_custom_call.1} parent=1 // pred_fallthru
      _
    %243 = vsyncpa [#allocation4], 1
    %244 = vsyncpa [#allocation5], 1

</llo_original>
